<compile_context>
chip_gen: v5e
topology: v5e:2x2
jax: 0.10.0
libtpu: 0.0.40
codegen_flags: <defaults>
</compile_context>

<pallas_src>
import jax
import jax.numpy as jnp
from jax.experimental import pallas as pl
from jax.experimental.pallas import tpu as pltpu


def _round_up(n, m):
    return ((n + m - 1) // m) * m


# ----------------------------------------------------------------------------
# Kernel
# ----------------------------------------------------------------------------
def vae_forward_kernel(
    x_ref, eps_ref,
    w1_ref, b1_ref,        # encoder Linear (x_dim -> h_pad)
    w23_ref, b23_ref,      # fused mu|log_var head (h_pad -> 128, cols >2z are 0)
    w4_ref, b4_ref,        # decoder Linear (z -> h_pad)
    w5_ref, b5_ref,        # fc5 (h_pad -> x_dim)
    xr_ref, mu_ref, lv_ref,
):
    z_dim = eps_ref.shape[-1]

    # NOTE: for a partial final batch tile, the out-of-bounds rows compute on
    # stale VMEM data (exp() may produce inf/NaN there) but those rows are
    # clipped on writeback and never contaminate valid rows -- benign.
    x = x_ref[...]

    # ---- encode: h = relu(x @ W1 + b1); padded h columns stay exactly 0 ----
    h = jnp.dot(x, w1_ref[...], preferred_element_type=jnp.float32) + b1_ref[...]
    h = jnp.maximum(h, 0.0)

    # ---- fused mu/log_var head: one lane-dense MXU pass ----
    head = jnp.dot(h, w23_ref[...], preferred_element_type=jnp.float32) + b23_ref[...]
    mu = head[:, :z_dim]
    log_var = head[:, z_dim:2 * z_dim]

    # ---- reparameterize: z = mu + eps * exp(log_var / 2) ----
    std = jnp.exp(log_var * 0.5)
    z = mu + eps_ref[...] * std

    # ---- decode ----
    d = jnp.dot(z, w4_ref[...], preferred_element_type=jnp.float32) + b4_ref[...]
    d = jnp.maximum(d, 0.0)
    xr = jnp.dot(d, w5_ref[...], preferred_element_type=jnp.float32) + b5_ref[...]

    # Unpadded stores: masked vst into VMEM is cheap (mem-bound kernel) and the
    # HBM writeback now only carries useful bytes; no wrapper-side slices.
    xr_ref[...] = xr
    mu_ref[...] = mu
    lv_ref[...] = log_var


# ----------------------------------------------------------------------------
# Wrapper
# ----------------------------------------------------------------------------
def _choose_tm(B, block_b):
    """Batch-tile choice: big tiles to amortize per-step overhead, and for
    B > 1024 force >= 2 grid steps so both TCs on v7x share the batch axis."""
    block_b = max(8, _round_up(block_b, 8))
    if B > 1024:
        return min(block_b, _round_up(-(-B // 2), 8))
    return min(B, block_b)


def vae_forward(x, eps, packed, *, block_b=2048):
    """x: [B, x_dim] f32; eps: [B, z_dim] f32; packed: dict from pack_params."""
    B, x_dim = x.shape
    z_dim = eps.shape[-1]
    h_pad = packed["w1p"].shape[1]
    head_pad = packed["w23p"].shape[1]

    tm = _choose_tm(B, block_b)
    grid = (pl.cdiv(B, tm),)

    row = lambda i: (i, 0)      # batch-tiled operands
    const = lambda i: (0, 0)    # weights/biases stay VMEM-resident (no re-DMA)

    flops = 2 * B * (x_dim * h_pad + h_pad * head_pad + z_dim * h_pad + h_pad * x_dim)
    bytes_accessed = 4 * (
        x.size + eps.size
        + sum(int(v.size) for v in packed.values())
        + B * (x_dim + 2 * z_dim)
    )
    cost = pl.CostEstimate(
        flops=flops, transcendentals=B * z_dim, bytes_accessed=bytes_accessed
    )

    x_reconst, mu, log_var = pl.pallas_call(
        vae_forward_kernel,
        out_shape=(
            jax.ShapeDtypeStruct((B, x_dim), jnp.float32),
            jax.ShapeDtypeStruct((B, z_dim), jnp.float32),
            jax.ShapeDtypeStruct((B, z_dim), jnp.float32),
        ),
        grid_spec=pltpu.PrefetchScalarGridSpec(
            num_scalar_prefetch=0,
            grid=grid,
            in_specs=[
                pl.BlockSpec((tm, x_dim), row),                 # x
                pl.BlockSpec((tm, z_dim), row),                 # eps
                pl.BlockSpec((x_dim, h_pad), const),            # w1 (h-padded)
                pl.BlockSpec((1, h_pad), const),                # b1
                pl.BlockSpec((h_pad, head_pad), const),         # w23 (fused, padded)
                pl.BlockSpec((1, head_pad), const),             # b23
                pl.BlockSpec((z_dim, h_pad), const),            # w4 (h-padded)
                pl.BlockSpec((1, h_pad), const),                # b4
                pl.BlockSpec((h_pad, x_dim), const),            # w5 (h-padded rows)
                pl.BlockSpec((1, x_dim), const),                # b5
            ],
            out_specs=[
                pl.BlockSpec((tm, x_dim), row),                 # x_reconst
                pl.BlockSpec((tm, z_dim), row),                 # mu
                pl.BlockSpec((tm, z_dim), row),                 # log_var
            ],
        ),
        compiler_params=pltpu.CompilerParams(
            dimension_semantics=("parallel",),
            vmem_limit_bytes=64 * 1024 * 1024,   # safe headroom for v5e's 16 MiB default
        ),
        cost_estimate=cost,
    )(
        x, eps,
        packed["w1p"], packed["b1p"],
        packed["w23p"], packed["b23p"],
        packed["w4p"], packed["b4p"],
        packed["w5p"], packed["b5"],
    )

    return x_reconst, mu, log_var


# ----------------------------------------------------------------------------
# Parameter construction / packing
# ----------------------------------------------------------------------------
def init_params(key, x_dim=173, h_dim=20, z_dim=10):
    """Kaiming-normal weights (std = sqrt(2/fan_in)), zero biases.
    Weights stored as [in, out] (transpose of torch's [out, in])."""
    ks = jax.random.split(key, 5)

    def kaiming(k, fan_in, fan_out):
        return (jax.random.normal(k, (fan_in, fan_out), jnp.float32)
                * jnp.sqrt(2.0 / fan_in))

    return {
        "w1": kaiming(ks[0], x_dim, h_dim), "b1": jnp.zeros((1, h_dim), jnp.float32),
        "w2": kaiming(ks[1], h_dim, z_dim), "b2": jnp.zeros((1, z_dim), jnp.float32),
        "w3": kaiming(ks[2], h_dim, z_dim), "b3": jnp.zeros((1, z_dim), jnp.float32),
        "w4": kaiming(ks[3], z_dim, h_dim), "b4": jnp.zeros((1, h_dim), jnp.float32),
        "w5": kaiming(ks[4], h_dim, x_dim), "b5": jnp.zeros((1, x_dim), jnp.float32),
    }


def pack_params(p, x_dim, z_dim):
    """One-time (outside the hot path) fuse/pad of weights:
      * h_dim padded to 128 so hidden activations are full vregs (padding
        columns/rows are exactly zero, so results are bit-identical).
      * w2|w3 fused into a single [h_pad, 128] head weight (cols >= 2z zero).
      * w5 left at its logical 173 output lanes (unpadded writeback)."""
    h_dim = p["w1"].shape[1]
    h_pad = _round_up(h_dim, 128)
    head_pad = _round_up(2 * z_dim, 128)

    w1p = jnp.zeros((x_dim, h_pad), jnp.float32).at[:, :h_dim].set(p["w1"])
    b1p = jnp.zeros((1, h_pad), jnp.float32).at[:, :h_dim].set(p["b1"])

    w23 = jnp.concatenate([p["w2"], p["w3"]], axis=1)          # [h, 2z]
    b23 = jnp.concatenate([p["b2"], p["b3"]], axis=1)          # [1, 2z]
    w23p = jnp.zeros((h_pad, head_pad), jnp.float32).at[:h_dim, :2 * z_dim].set(w23)
    b23p = jnp.zeros((1, head_pad), jnp.float32).at[:, :2 * z_dim].set(b23)

    w4p = jnp.zeros((z_dim, h_pad), jnp.float32).at[:, :h_dim].set(p["w4"])
    b4p = jnp.zeros((1, h_pad), jnp.float32).at[:, :h_dim].set(p["b4"])

    w5p = jnp.zeros((h_pad, x_dim), jnp.float32).at[:h_dim, :].set(p["w5"])

    return {
        "w1p": w1p, "b1p": b1p,
        "w23p": w23p, "b23p": b23p,
        "w4p": w4p, "b4p": b4p,
        "w5p": w5p, "b5": p["b5"],
    }


def vae_forward_ref(x, params, eps):
    """Pure-JAX reference of the torch forward pass (raw params)."""
    h = jnp.maximum(x @ params["w1"] + params["b1"], 0.0)
    mu = h @ params["w2"] + params["b2"]
    log_var = h @ params["w3"] + params["b3"]
    z = mu + eps * jnp.exp(log_var / 2.0)
    d = jnp.maximum(z @ params["w4"] + params["b4"], 0.0)
    x_reconst = d @ params["w5"] + params["b5"]
    return x_reconst, mu, log_var


# TODO(synk): fuse eps generation (pltpu.prng_seed + pltpu.stateful_normal) and
# the reconstruction/KL loss reduction into this kernel for training/serving;
# eps is kept as an input here so the forward pass stays deterministic/testable.
# TODO(synk): optional bf16 x / x_reconst at the HBM boundary (~1.5x at large B)
# if downstream tolerance allows; kept f32 to match the torch module exactly.

if __name__ == "__main__":
    X_DIM, H_DIM, Z_DIM = 173, 20, 10
    BATCH = 8

    key = jax.random.PRNGKey(0)
    k_param, k_x, k_eps = jax.random.split(key, 3)

    raw = init_params(k_param, X_DIM, H_DIM, Z_DIM)
    packed = pack_params(raw, X_DIM, Z_DIM)

    # --- small serving-style batch (single grid step) ---
    x = jax.random.normal(k_x, (BATCH, X_DIM), jnp.float32)
    eps = jax.random.normal(k_eps, (BATCH, Z_DIM), jnp.float32)   # torch.randn_like(std)

    x_reconst, mu, log_var = vae_forward(x, eps, packed)
    jax.block_until_ready((x_reconst, mu, log_var))

    xr_r, mu_r, lv_r = vae_forward_ref(x, raw, eps)
    assert jnp.allclose(x_reconst, xr_r, atol=1e-4, rtol=1e-4)
    assert jnp.allclose(mu, mu_r, atol=1e-5, rtol=1e-5)
    assert jnp.allclose(log_var, lv_r, atol=1e-5, rtol=1e-5)

    # --- multi-step grid with a partial final tile (exercises the pipeline) ---
    B2 = 44
    x2 = jax.random.normal(jax.random.PRNGKey(1), (B2, X_DIM), jnp.float32)
    eps2 = jax.random.normal(jax.random.PRNGKey(2), (B2, Z_DIM), jnp.float32)
    xr2, mu2, lv2 = vae_forward(x2, eps2, packed, block_b=16)   # grid=(3,), last tile partial
    jax.block_until_ready((xr2, mu2, lv2))

    xr2_r, mu2_r, lv2_r = vae_forward_ref(x2, raw, eps2)
    assert jnp.allclose(xr2, xr2_r, atol=1e-4, rtol=1e-4)
    assert jnp.allclose(mu2, mu2_r, atol=1e-5, rtol=1e-5)
    assert jnp.allclose(lv2, lv2_r, atol=1e-5, rtol=1e-5)

    print("KERNEL_OK")
</pallas_src>

<mosaic_0001>
module attributes {stable_mosaic.version = 11 : i64} {
  func.func @vae_forward_kernel(%arg0: i32, %arg1: memref<8x173xf32, #tpu.memory_space<vmem>>, %arg2: memref<8x10xf32, #tpu.memory_space<vmem>>, %arg3: memref<173x128xf32, #tpu.memory_space<vmem>>, %arg4: memref<1x128xf32, #tpu.memory_space<vmem>>, %arg5: memref<128x128xf32, #tpu.memory_space<vmem>>, %arg6: memref<1x128xf32, #tpu.memory_space<vmem>>, %arg7: memref<10x128xf32, #tpu.memory_space<vmem>>, %arg8: memref<1x128xf32, #tpu.memory_space<vmem>>, %arg9: memref<128x173xf32, #tpu.memory_space<vmem>>, %arg10: memref<1x173xf32, #tpu.memory_space<vmem>>, %arg11: memref<8x173xf32, #tpu.memory_space<vmem>>, %arg12: memref<8x10xf32, #tpu.memory_space<vmem>>, %arg13: memref<8x10xf32, #tpu.memory_space<vmem>>) attributes {dimension_semantics = [#tpu.dimension_semantics<parallel>], iteration_bounds = array<i64: 1>, scalar_prefetch = 0 : i64, scratch_operands = 0 : i64, tpu.core_type = #tpu.core_type<tc>, window_params = [{transform_indices = @transform_0, window_bounds = array<i64: 8, 173>}, {transform_indices = @transform_1, window_bounds = array<i64: 8, 10>}, {pipeline_mode = #tpu.pipeline_mode<synchronous>, transform_indices = @transform_2, window_bounds = array<i64: 173, 128>}, {pipeline_mode = #tpu.pipeline_mode<synchronous>, transform_indices = @transform_3, window_bounds = array<i64: 1, 128>}, {pipeline_mode = #tpu.pipeline_mode<synchronous>, transform_indices = @transform_4, window_bounds = array<i64: 128, 128>}, {pipeline_mode = #tpu.pipeline_mode<synchronous>, transform_indices = @transform_5, window_bounds = array<i64: 1, 128>}, {pipeline_mode = #tpu.pipeline_mode<synchronous>, transform_indices = @transform_6, window_bounds = array<i64: 10, 128>}, {pipeline_mode = #tpu.pipeline_mode<synchronous>, transform_indices = @transform_7, window_bounds = array<i64: 1, 128>}, {pipeline_mode = #tpu.pipeline_mode<synchronous>, transform_indices = @transform_8, window_bounds = array<i64: 128, 173>}, {pipeline_mode = #tpu.pipeline_mode<synchronous>, transform_indices = @transform_9, window_bounds = array<i64: 1, 173>}, {transform_indices = @transform_10, window_bounds = array<i64: 8, 173>}, {transform_indices = @transform_11, window_bounds = array<i64: 8, 10>}, {transform_indices = @transform_12, window_bounds = array<i64: 8, 10>}]} {
    %c0 = arith.constant 0 : index
    %c0_0 = arith.constant 0 : index
    %0 = vector.load %arg1[%c0, %c0_0] : memref<8x173xf32, #tpu.memory_space<vmem>>, vector<8x173xf32>
    %c0_1 = arith.constant 0 : index
    %c0_2 = arith.constant 0 : index
    %1 = vector.load %arg3[%c0_1, %c0_2] : memref<173x128xf32, #tpu.memory_space<vmem>>, vector<173x128xf32>
    %cst = arith.constant dense<0.000000e+00> : vector<8x128xf32>
    %2 = tpu.matmul %0, %1, %cst {dimension_numbers = #tpu.dot_dimension_numbers<[1], [0], [0], [1], [0, 0, 1, 1], [], []>} : vector<8x173xf32>, vector<173x128xf32>, vector<8x128xf32> -> vector<8x128xf32>
    %c0_3 = arith.constant 0 : index
    %c0_4 = arith.constant 0 : index
    %3 = vector.load %arg4[%c0_3, %c0_4] : memref<1x128xf32, #tpu.memory_space<vmem>>, vector<1x128xf32>
    %4 = vector.broadcast %3 : vector<1x128xf32> to vector<8x128xf32>
    %5 = arith.addf %2, %4 : vector<8x128xf32>
    %cst_5 = arith.constant 0.000000e+00 : f32
    %6 = vector.broadcast %cst_5 : f32 to vector<8x128xf32>
    %7 = arith.maximumf %5, %6 : vector<8x128xf32>
    %c0_6 = arith.constant 0 : index
    %c0_7 = arith.constant 0 : index
    %8 = vector.load %arg5[%c0_6, %c0_7] : memref<128x128xf32, #tpu.memory_space<vmem>>, vector<128x128xf32>
    %cst_8 = arith.constant dense<0.000000e+00> : vector<8x128xf32>
    %9 = tpu.matmul %7, %8, %cst_8 {dimension_numbers = #tpu.dot_dimension_numbers<[1], [0], [0], [1], [0, 0, 1, 1], [], []>} : vector<8x128xf32>, vector<128x128xf32>, vector<8x128xf32> -> vector<8x128xf32>
    %c0_9 = arith.constant 0 : index
    %c0_10 = arith.constant 0 : index
    %10 = vector.load %arg6[%c0_9, %c0_10] : memref<1x128xf32, #tpu.memory_space<vmem>>, vector<1x128xf32>
    %11 = vector.broadcast %10 : vector<1x128xf32> to vector<8x128xf32>
    %12 = arith.addf %9, %11 : vector<8x128xf32>
    %13 = vector.extract_strided_slice %12 {offsets = [0, 0], sizes = [8, 10], strides = [1, 1]} : vector<8x128xf32> to vector<8x10xf32>
    %14 = vector.extract_strided_slice %12 {offsets = [0, 10], sizes = [8, 10], strides = [1, 1]} : vector<8x128xf32> to vector<8x10xf32>
    %cst_11 = arith.constant 5.000000e-01 : f32
    %15 = vector.broadcast %cst_11 : f32 to vector<8x10xf32>
    %16 = arith.mulf %14, %15 : vector<8x10xf32>
    %17 = math.exp %16 : vector<8x10xf32>
    %c0_12 = arith.constant 0 : index
    %c0_13 = arith.constant 0 : index
    %18 = vector.load %arg2[%c0_12, %c0_13] : memref<8x10xf32, #tpu.memory_space<vmem>>, vector<8x10xf32>
    %19 = arith.mulf %18, %17 : vector<8x10xf32>
    %20 = arith.addf %13, %19 : vector<8x10xf32>
    %c0_14 = arith.constant 0 : index
    %c0_15 = arith.constant 0 : index
    %21 = vector.load %arg7[%c0_14, %c0_15] : memref<10x128xf32, #tpu.memory_space<vmem>>, vector<10x128xf32>
    %cst_16 = arith.constant dense<0.000000e+00> : vector<8x128xf32>
    %22 = tpu.matmul %20, %21, %cst_16 {dimension_numbers = #tpu.dot_dimension_numbers<[1], [0], [0], [1], [0, 0, 1, 1], [], []>} : vector<8x10xf32>, vector<10x128xf32>, vector<8x128xf32> -> vector<8x128xf32>
    %c0_17 = arith.constant 0 : index
    %c0_18 = arith.constant 0 : index
    %23 = vector.load %arg8[%c0_17, %c0_18] : memref<1x128xf32, #tpu.memory_space<vmem>>, vector<1x128xf32>
    %24 = vector.broadcast %23 : vector<1x128xf32> to vector<8x128xf32>
    %25 = arith.addf %22, %24 : vector<8x128xf32>
    %cst_19 = arith.constant 0.000000e+00 : f32
    %26 = vector.broadcast %cst_19 : f32 to vector<8x128xf32>
    %27 = arith.maximumf %25, %26 : vector<8x128xf32>
    %c0_20 = arith.constant 0 : index
    %c0_21 = arith.constant 0 : index
    %28 = vector.load %arg9[%c0_20, %c0_21] : memref<128x173xf32, #tpu.memory_space<vmem>>, vector<128x173xf32>
    %cst_22 = arith.constant dense<0.000000e+00> : vector<8x173xf32>
    %29 = tpu.matmul %27, %28, %cst_22 {dimension_numbers = #tpu.dot_dimension_numbers<[1], [0], [0], [1], [0, 0, 1, 1], [], []>} : vector<8x128xf32>, vector<128x173xf32>, vector<8x173xf32> -> vector<8x173xf32>
    %c0_23 = arith.constant 0 : index
    %c0_24 = arith.constant 0 : index
    %30 = vector.load %arg10[%c0_23, %c0_24] : memref<1x173xf32, #tpu.memory_space<vmem>>, vector<1x173xf32>
    %31 = vector.broadcast %30 : vector<1x173xf32> to vector<8x173xf32>
    %32 = arith.addf %29, %31 : vector<8x173xf32>
    %c0_25 = arith.constant 0 : index
    %c0_26 = arith.constant 0 : index
    %33 = vector.load %arg11[%c0_25, %c0_26] : memref<8x173xf32, #tpu.memory_space<vmem>>, vector<8x173xf32>
    tpu.vector_store %arg11[%c0_25, %c0_26], %32 {strides = array<i32>} : memref<8x173xf32, #tpu.memory_space<vmem>>, vector<8x173xf32>,
    %c0_27 = arith.constant 0 : index
    %c0_28 = arith.constant 0 : index
    %34 = vector.load %arg12[%c0_27, %c0_28] : memref<8x10xf32, #tpu.memory_space<vmem>>, vector<8x10xf32>
    tpu.vector_store %arg12[%c0_27, %c0_28], %13 {strides = array<i32>} : memref<8x10xf32, #tpu.memory_space<vmem>>, vector<8x10xf32>,
    %c0_29 = arith.constant 0 : index
    %c0_30 = arith.constant 0 : index
    %35 = vector.load %arg13[%c0_29, %c0_30] : memref<8x10xf32, #tpu.memory_space<vmem>>, vector<8x10xf32>
    tpu.vector_store %arg13[%c0_29, %c0_30], %14 {strides = array<i32>} : memref<8x10xf32, #tpu.memory_space<vmem>>, vector<8x10xf32>,
    return
  }
  func.func @transform_0(%arg0: i32) -> (i32, i32) {
    %c0_i32 = arith.constant 0 : i32
    %c0_i32_0 = arith.constant 0 : i32
    return %arg0, %c0_i32 : i32, i32
  }
  func.func @transform_1(%arg0: i32) -> (i32, i32) {
    %c0_i32 = arith.constant 0 : i32
    %c0_i32_0 = arith.constant 0 : i32
    return %arg0, %c0_i32 : i32, i32
  }
  func.func @transform_2(%arg0: i32) -> (i32, i32) {
    %c0_i32 = arith.constant 0 : i32
    %c0_i32_0 = arith.constant 0 : i32
    %c0_i32_1 = arith.constant 0 : i32
    return %c0_i32, %c0_i32_0 : i32, i32
  }
  func.func @transform_3(%arg0: i32) -> (i32, i32) {
    %c0_i32 = arith.constant 0 : i32
    %c0_i32_0 = arith.constant 0 : i32
    %c0_i32_1 = arith.constant 0 : i32
    return %c0_i32, %c0_i32_0 : i32, i32
  }
  func.func @transform_4(%arg0: i32) -> (i32, i32) {
    %c0_i32 = arith.constant 0 : i32
    %c0_i32_0 = arith.constant 0 : i32
    %c0_i32_1 = arith.constant 0 : i32
    return %c0_i32, %c0_i32_0 : i32, i32
  }
  func.func @transform_5(%arg0: i32) -> (i32, i32) {
    %c0_i32 = arith.constant 0 : i32
    %c0_i32_0 = arith.constant 0 : i32
    %c0_i32_1 = arith.constant 0 : i32
    return %c0_i32, %c0_i32_0 : i32, i32
  }
  func.func @transform_6(%arg0: i32) -> (i32, i32) {
    %c0_i32 = arith.constant 0 : i32
    %c0_i32_0 = arith.constant 0 : i32
    %c0_i32_1 = arith.constant 0 : i32
    return %c0_i32, %c0_i32_0 : i32, i32
  }
  func.func @transform_7(%arg0: i32) -> (i32, i32) {
    %c0_i32 = arith.constant 0 : i32
    %c0_i32_0 = arith.constant 0 : i32
    %c0_i32_1 = arith.constant 0 : i32
    return %c0_i32, %c0_i32_0 : i32, i32
  }
  func.func @transform_8(%arg0: i32) -> (i32, i32) {
    %c0_i32 = arith.constant 0 : i32
    %c0_i32_0 = arith.constant 0 : i32
    %c0_i32_1 = arith.constant 0 : i32
    return %c0_i32, %c0_i32_0 : i32, i32
  }
  func.func @transform_9(%arg0: i32) -> (i32, i32) {
    %c0_i32 = arith.constant 0 : i32
    %c0_i32_0 = arith.constant 0 : i32
    %c0_i32_1 = arith.constant 0 : i32
    return %c0_i32, %c0_i32_0 : i32, i32
  }
  func.func @transform_10(%arg0: i32) -> (i32, i32) {
    %c0_i32 = arith.constant 0 : i32
    %c0_i32_0 = arith.constant 0 : i32
    return %arg0, %c0_i32 : i32, i32
  }
  func.func @transform_11(%arg0: i32) -> (i32, i32) {
    %c0_i32 = arith.constant 0 : i32
    %c0_i32_0 = arith.constant 0 : i32
    return %arg0, %c0_i32 : i32, i32
  }
  func.func @transform_12(%arg0: i32) -> (i32, i32) {
    %c0_i32 = arith.constant 0 : i32
    %c0_i32_0 = arith.constant 0 : i32
    return %arg0, %c0_i32 : i32, i32
  }
}

</mosaic_0001>

<llo_original>
// kernel: tpu_custom_call.1
$region0: #{tpu_custom_call.1}
  #allocation0 [shape = 'u32[]', space=smem, size = 0x4, offset = 0x4, fixed_abs, tag = 'smem constant byte address 0x4 - core index']
  #allocation1 [shape = 'u32[72,128]{1,0:T(1,128)}', space=vmem, size = 0x9000, scoped, tag = 'internal scratch']
  %s0 = inlined_call_operand.vmem [shape: f32[8,173], index: 0, kind: input, shape index: {}]
  %s1 = inlined_call_operand.vmem [shape: f32[8,10], index: 1, kind: input, shape index: {}]
  %s2 = inlined_call_operand.vmem [shape: f32[173,128], index: 2, kind: input, shape index: {}]
  %s3 = inlined_call_operand.vmem [shape: f32[1,128], index: 3, kind: input, shape index: {}]
  %s4 = inlined_call_operand.vmem [shape: f32[128,128], index: 4, kind: input, shape index: {}]
  %s5 = inlined_call_operand.vmem [shape: f32[1,128], index: 5, kind: input, shape index: {}]
  %s6 = inlined_call_operand.vmem [shape: f32[10,128], index: 6, kind: input, shape index: {}]
  %s7 = inlined_call_operand.vmem [shape: f32[1,128], index: 7, kind: input, shape index: {}]
  %s8 = inlined_call_operand.vmem [shape: f32[128,173], index: 8, kind: input, shape index: {}]
  %s9 = inlined_call_operand.vmem [shape: f32[1,173], index: 9, kind: input, shape index: {}]
  %s10 = inlined_call_operand.hbm [shape: f32[8,173], index: 10, kind: output, shape index: {0}]
  %s11 = inlined_call_operand.hbm [shape: f32[8,10], index: 11, kind: output, shape index: {1}]
  %s12 = inlined_call_operand.hbm [shape: f32[8,10], index: 12, kind: output, shape index: {2}]
  %13 = xla_tuple %s10, %s11, %s12
  %s14 = sld [smem:[#allocation0]]
  $region66: #{tpu_custom_call.1} parent=0
    _
  %s16 = ssub.s32 1, %s14
  %s17 = scalar_select 0, %s16, %s14
  $region1: #{tpu_custom_call.1} parent=0
    #allocation2 [shape = 'u8[8192]{0}', space=vmem, size = 0x2000, scoped, tag = 'output window, operand 0, single buffered']
    #allocation3 [shape = 's32[1]{0}', space=sflag, size = 0x4, scoped, tag = 'scoped memory for tpu_custom_call.1']
    #allocation4 [shape = 'u8[4096]{0}', space=vmem, size = 0x1000, scoped, tag = 'output window, operand 1, single buffered']
    #allocation5 [shape = 's32[1]{0}', space=sflag, size = 0x4, scoped, tag = 'scoped memory for tpu_custom_call.1']
    #allocation6 [shape = 'u8[4096]{0}', space=vmem, size = 0x1000, scoped, tag = 'output window, operand 2, single buffered']
    %18 = vsyncpa [#allocation3], 0
    %19 = vsyncpa [#allocation5], 0
    // Predicated region
    $region2: #{tpu_custom_call.1} parent=1 // pred_check
      _
    $region3: #{tpu_custom_call.1} parent=1 // pred_check_branch
      %21 = sbr.rel (0) target = $region5
    $region4: #{tpu_custom_call.1} parent=1 // pred_region
      _
    $region5: #{tpu_custom_call.1} parent=1 // pred_fallthru
      _
    // Predicated region
    $region6: #{tpu_custom_call.1} parent=1 // pred_check
      _
    $region7: #{tpu_custom_call.1} parent=1 // pred_check_branch
      %23 = sbr.rel (0) target = $region9
    $region8: #{tpu_custom_call.1} parent=1 // pred_region
      _
    $region9: #{tpu_custom_call.1} parent=1 // pred_fallthru
      _
    // Predicated region
    $region10: #{tpu_custom_call.1} parent=1 // pred_check
      _
    $region11: #{tpu_custom_call.1} parent=1 // pred_check_branch
      %25 = sbr.rel (0) target = $region13
    $region12: #{tpu_custom_call.1} parent=1 // pred_region
      _
    $region13: #{tpu_custom_call.1} parent=1 // pred_fallthru
      _
    // Predicated region
    $region14: #{tpu_custom_call.1} parent=1 // pred_check
      _
    $region15: #{tpu_custom_call.1} parent=1 // pred_check_branch
      %27 = sbr.rel (0) target = $region17
    $region16: #{tpu_custom_call.1} parent=1 // pred_region
      _
    $region17: #{tpu_custom_call.1} parent=1 // pred_fallthru
      _
    // Predicated region
    $region18: #{tpu_custom_call.1} parent=1 // pred_check
      _
    $region19: #{tpu_custom_call.1} parent=1 // pred_check_branch
      %29 = sbr.rel (0) target = $region21
    $region20: #{tpu_custom_call.1} parent=1 // pred_region
      _
    $region21: #{tpu_custom_call.1} parent=1 // pred_fallthru
      _
    // Predicated region
    $region22: #{tpu_custom_call.1} parent=1 // pred_check
      _
    $region23: #{tpu_custom_call.1} parent=1 // pred_check_branch
      %31 = sbr.rel (0) target = $region25
    $region24: #{tpu_custom_call.1} parent=1 // pred_region
      _
    $region25: #{tpu_custom_call.1} parent=1 // pred_fallthru
      _
    // Predicated region
    $region26: #{tpu_custom_call.1} parent=1 // pred_check
      _
    $region27: #{tpu_custom_call.1} parent=1 // pred_check_branch
      %33 = sbr.rel (0) target = $region29
    $region28: #{tpu_custom_call.1} parent=1 // pred_region
      _
    $region29: #{tpu_custom_call.1} parent=1 // pred_fallthru
      _
    // Predicated region
    $region30: #{tpu_custom_call.1} parent=1 // pred_check
      _
    $region31: #{tpu_custom_call.1} parent=1 // pred_check_branch
      %35 = sbr.rel (0) target = $region33
    $region32: #{tpu_custom_call.1} parent=1 // pred_region
      _
    $region33: #{tpu_custom_call.1} parent=1 // pred_fallthru
      _
    // Predicated region
    $region34: #{tpu_custom_call.1} parent=1 // pred_check
      _
    $region35: #{tpu_custom_call.1} parent=1 // pred_check_branch
      %37 = sbr.rel (0) target = $region37
    $region36: #{tpu_custom_call.1} parent=1 // pred_region
      _
    $region37: #{tpu_custom_call.1} parent=1 // pred_fallthru
      _
    // Predicated region
    $region38: #{tpu_custom_call.1} parent=1 // pred_check
      _
    $region39: #{tpu_custom_call.1} parent=1 // pred_check_branch
      %39 = sbr.rel (0) target = $region41
    $region40: #{tpu_custom_call.1} parent=1 // pred_region
      _
    $region41: #{tpu_custom_call.1} parent=1 // pred_fallthru
      _
    %v40 = vld [vmem:[%s0] sm:$0xff]
    %v41 = vld [vmem:[%s0 + $0x8] sm:$0xff]
    %v42 = vld [vmem:[%s2] sm:$0xff]
    %v43 = vld [vmem:[%s2 + $0x8] sm:$0xff]
    %v44 = vld [vmem:[%s2 + $0x10] sm:$0xff]
    %v45 = vld [vmem:[%s2 + $0x18] sm:$0xff]
    %v46 = vld [vmem:[%s2 + $0x20] sm:$0xff]
    %v47 = vld [vmem:[%s2 + $0x28] sm:$0xff]
    %v48 = vld [vmem:[%s2 + $0x30] sm:$0xff]
    %v49 = vld [vmem:[%s2 + $0x38] sm:$0xff]
    %v50 = vld [vmem:[%s2 + $0x40] sm:$0xff]
    %v51 = vld [vmem:[%s2 + $0x48] sm:$0xff]
    %v52 = vld [vmem:[%s2 + $0x50] sm:$0xff]
    %v53 = vld [vmem:[%s2 + $0x58] sm:$0xff]
    %v54 = vld [vmem:[%s2 + $0x60] sm:$0xff]
    %v55 = vld [vmem:[%s2 + $0x68] sm:$0xff]
    %v56 = vld [vmem:[%s2 + $0x70] sm:$0xff]
    %v57 = vld [vmem:[%s2 + $0x78] sm:$0xff]
    %v58 = vld [vmem:[%s2 + $0x80] sm:$0xff]
    %v59 = vld [vmem:[%s2 + $0x88] sm:$0xff]
    %v60 = vld [vmem:[%s2 + $0x90] sm:$0xff]
    %v61 = vld [vmem:[%s2 + $0x98] sm:$0xff]
    %v62 = vld [vmem:[%s2 + $0xa0] sm:$0xff]
    %v63 = vld [vmem:[%s2 + $0xa8] sm:$0x1f]
    %v64 = vld [vmem:[%s3] sm:$0x1]
    %v66 = vperm.slane %v64, 0
    %vm68 = vcmask 367616
    %v70 = vsel %vm68, %v41, 0
    %vm72 = vcmask 1044480
    %v74 = vsel %vm72, %v63, 0
    %76 = vmatpush.msra.mxu0 %v57
    %77 = vmatpush.msra.mxu0 %v56
    %78 = vmatpush.msra.mxu0 %v55
    %79 = vmatpush.msra.mxu0 %v54
    %80 = vmatpush.msra.mxu0 %v53
    %81 = vmatpush.msra.mxu0 %v52
    %82 = vmatpush.msra.mxu0 %v51
    %83 = vmatpush.msra.mxu0 %v50
    %84 = vmatpush.msra.mxu0 %v49
    %85 = vmatpush.msra.mxu0 %v48
    %86 = vmatpush.msra.mxu0 %v47
    %87 = vmatpush.msra.mxu0 %v46
    %88 = vmatpush.msra.mxu0 %v45
    %89 = vmatpush.msra.mxu0 %v44
    %90 = vmatpush.msra.mxu0 %v43
    %91 = vmatpush.msra.mxu0 %v42
    %92 = vmatmul.f32.gmra.mxu0 %v40
    %v93 = vpop.f32.mrf.mxu0
    %v94 = vadd.f32 %v66, %v93
    %95 = vdwg.mxu0
    %96 = vmatpush.msra.mxu0 0.0
    %97 = vmatpush.msra.mxu0 0.0
    %98 = vmatpush.msra.mxu0 0.0
    %99 = vmatpush.msra.mxu0 0.0
    %100 = vmatpush.msra.mxu0 0.0
    %101 = vmatpush.msra.mxu0 0.0
    %102 = vmatpush.msra.mxu0 0.0
    %103 = vmatpush.msra.mxu0 0.0
    %104 = vmatpush.msra.mxu0 0.0
    %105 = vmatpush.msra.mxu0 0.0
    %106 = vmatpush.msra.mxu0 %v74
    %107 = vmatpush.msra.mxu0 %v62
    %108 = vmatpush.msra.mxu0 %v61
    %109 = vmatpush.msra.mxu0 %v60
    %110 = vmatpush.msra.mxu0 %v59
    %111 = vmatpush.msra.mxu0 %v58
    %112 = vmatmul.f32.gmra.mxu0 %v70
    %v113 = vpop.f32.mrf.mxu0
    %v114 = vadd.f32 %v94, %v113
    %115 = vdwg.mxu0
    %v116 = vmax.f32 %v114, 0.0
    %v117 = vld [vmem:[%s4] sm:$0xff]
    %v118 = vld [vmem:[%s4 + $0x8] sm:$0xff]
    %v119 = vld [vmem:[%s4 + $0x10] sm:$0xff]
    %v120 = vld [vmem:[%s4 + $0x18] sm:$0xff]
    %v121 = vld [vmem:[%s4 + $0x20] sm:$0xff]
    %v122 = vld [vmem:[%s4 + $0x28] sm:$0xff]
    %v123 = vld [vmem:[%s4 + $0x30] sm:$0xff]
    %v124 = vld [vmem:[%s4 + $0x38] sm:$0xff]
    %v125 = vld [vmem:[%s4 + $0x40] sm:$0xff]
    %v126 = vld [vmem:[%s4 + $0x48] sm:$0xff]
    %v127 = vld [vmem:[%s4 + $0x50] sm:$0xff]
    %v128 = vld [vmem:[%s4 + $0x58] sm:$0xff]
    %v129 = vld [vmem:[%s4 + $0x60] sm:$0xff]
    %v130 = vld [vmem:[%s4 + $0x68] sm:$0xff]
    %v131 = vld [vmem:[%s4 + $0x70] sm:$0xff]
    %v132 = vld [vmem:[%s4 + $0x78] sm:$0xff]
    %v133 = vld [vmem:[%s5] sm:$0x1]
    %v135 = vperm.slane %v133, 0
    %137 = vmatpush.msra.mxu0 %v132
    %138 = vmatpush.msra.mxu0 %v131
    %139 = vmatpush.msra.mxu0 %v130
    %140 = vmatpush.msra.mxu0 %v129
    %141 = vmatpush.msra.mxu0 %v128
    %142 = vmatpush.msra.mxu0 %v127
    %143 = vmatpush.msra.mxu0 %v126
    %144 = vmatpush.msra.mxu0 %v125
    %145 = vmatpush.msra.mxu0 %v124
    %146 = vmatpush.msra.mxu0 %v123
    %147 = vmatpush.msra.mxu0 %v122
    %148 = vmatpush.msra.mxu0 %v121
    %149 = vmatpush.msra.mxu0 %v120
    %150 = vmatpush.msra.mxu0 %v119
    %151 = vmatpush.msra.mxu0 %v118
    %152 = vmatpush.msra.mxu0 %v117
    %153 = vmatmul.f32.gmra.mxu0 %v116
    %v154 = vpop.f32.mrf.mxu0
    %v155 = vadd.f32 %v135, %v154
    %156 = vdwg.mxu0
    %v157 = vmul.f32 %v155, 0.5
    %v158 = vmul.f32 %v157, 1.442695
    %v159 = vpow.pop %v158
    %v160 = vld [vmem:[%s1] sm:$0xff]
    %162 = vrot.lane.b32.xlu0 %v159, 118
    %v163 = vpop.permute.xlu0 %162
    %v165 = vmul.f32 %v160, %v163
    %v166 = vadd.f32 %v155, %v165
    %v167 = vld [vmem:[%s6] sm:$0xff]
    %v168 = vld [vmem:[%s6 + $0x8] sm:$0x3]
    %v169 = vld [vmem:[%s7] sm:$0x1]
    %v171 = vperm.slane %v169, 0
    %vm173 = vcmask 80896
    %v175 = vsel %vm173, %v166, 0
    %vm177 = vcmask 1041408
    %v179 = vsel %vm177, %v168, 0
    %181 = vmatpush.msra.mxu0 0.0
    %182 = vmatpush.msra.mxu0 0.0
    %183 = vmatpush.msra.mxu0 0.0
    %184 = vmatpush.msra.mxu0 0.0
    %185 = vmatpush.msra.mxu0 0.0
    %186 = vmatpush.msra.mxu0 0.0
    %187 = vmatpush.msra.mxu0 0.0
    %188 = vmatpush.msra.mxu0 0.0
    %189 = vmatpush.msra.mxu0 0.0
    %190 = vmatpush.msra.mxu0 0.0
    %191 = vmatpush.msra.mxu0 0.0
    %192 = vmatpush.msra.mxu0 0.0
    %193 = vmatpush.msra.mxu0 0.0
    %194 = vmatpush.msra.mxu0 0.0
    %195 = vmatpush.msra.mxu0 %v179
    %196 = vmatpush.msra.mxu0 %v167
    %197 = vmatmul.f32.gmra.mxu0 %v175
    %v198 = vpop.f32.mrf.mxu0
    %v199 = vadd.f32 %v171, %v198
    %200 = vdwg.mxu0
    %v201 = vmax.f32 %v199, 0.0
    %v202 = vld [vmem:[%s8] sm:$0xff]
    %v203 = vld [vmem:[%s8 + $0x8] sm:$0xff]
    %v204 = vld [vmem:[%s8 + $0x10] sm:$0xff]
    %v205 = vld [vmem:[%s8 + $0x18] sm:$0xff]
    %v206 = vld [vmem:[%s8 + $0x20] sm:$0xff]
    %v207 = vld [vmem:[%s8 + $0x28] sm:$0xff]
    %v208 = vld [vmem:[%s8 + $0x30] sm:$0xff]
    %v209 = vld [vmem:[%s8 + $0x38] sm:$0xff]
    %v210 = vld [vmem:[%s8 + $0x40] sm:$0xff]
    %v211 = vld [vmem:[%s8 + $0x48] sm:$0xff]
    %v212 = vld [vmem:[%s8 + $0x50] sm:$0xff]
    %v213 = vld [vmem:[%s8 + $0x58] sm:$0xff]
    %v214 = vld [vmem:[%s8 + $0x60] sm:$0xff]
    %v215 = vld [vmem:[%s8 + $0x68] sm:$0xff]
    %v216 = vld [vmem:[%s8 + $0x70] sm:$0xff]
    %v217 = vld [vmem:[%s8 + $0x78] sm:$0xff]
    %v218 = vld [vmem:[%s8 + $0x80] sm:$0xff]
    %v219 = vld [vmem:[%s8 + $0x88] sm:$0xff]
    %v220 = vld [vmem:[%s8 + $0x90] sm:$0xff]
    %v221 = vld [vmem:[%s8 + $0x98] sm:$0xff]
    %v222 = vld [vmem:[%s8 + $0xa0] sm:$0xff]
    %v223 = vld [vmem:[%s8 + $0xa8] sm:$0xff]
    %v224 = vld [vmem:[%s8 + $0xb0] sm:$0xff]
    %v225 = vld [vmem:[%s8 + $0xb8] sm:$0xff]
    %v226 = vld [vmem:[%s8 + $0xc0] sm:$0xff]
    %v227 = vld [vmem:[%s8 + $0xc8] sm:$0xff]
    %v228 = vld [vmem:[%s8 + $0xd0] sm:$0xff]
    %v229 = vld [vmem:[%s8 + $0xd8] sm:$0xff]
    %v230 = vld [vmem:[%s8 + $0xe0] sm:$0xff]
    %v231 = vld [vmem:[%s8 + $0xe8] sm:$0xff]
    %v232 = vld [vmem:[%s8 + $0xf0] sm:$0xff]
    %v233 = vld [vmem:[%s8 + $0xf8] sm:$0xff]
    %v234 = vld [vmem:[%s9] sm:$0x3]
    %v236 = vperm.slane %v234, 0
    %v237 = vperm.slane %v234, 1
    %240 = vmatpush.msra.mxu0 %v232
    %241 = vmatpush.msra.mxu0 %v230
    %242 = vmatpush.msra.mxu0 %v228
    %243 = vmatpush.msra.mxu0 %v226
    %244 = vmatpush.msra.mxu0 %v224
    %245 = vmatpush.msra.mxu0 %v222
    %246 = vmatpush.msra.mxu0 %v220
    %247 = vmatpush.msra.mxu0 %v218
    %248 = vmatpush.msra.mxu0 %v216
    %249 = vmatpush.msra.mxu0 %v214
    %250 = vmatpush.msra.mxu0 %v212
    %251 = vmatpush.msra.mxu0 %v210
    %252 = vmatpush.msra.mxu0 %v208
    %253 = vmatpush.msra.mxu0 %v206
    %254 = vmatpush.msra.mxu0 %v204
    %255 = vmatpush.msra.mxu0 %v202
    %256 = vmatmul.f32.gmra.mxu0 %v201
    %v257 = vpop.f32.mrf.mxu0
    %v258 = vadd.f32 %v236, %v257
    %259 = vdwg.mxu0
    %260 = vmatpush.msra.mxu0 %v233
    %261 = vmatpush.msra.mxu0 %v231
    %262 = vmatpush.msra.mxu0 %v229
    %263 = vmatpush.msra.mxu0 %v227
    %264 = vmatpush.msra.mxu0 %v225
    %265 = vmatpush.msra.mxu0 %v223
    %266 = vmatpush.msra.mxu0 %v221
    %267 = vmatpush.msra.mxu0 %v219
    %268 = vmatpush.msra.mxu0 %v217
    %269 = vmatpush.msra.mxu0 %v215
    %270 = vmatpush.msra.mxu0 %v213
    %271 = vmatpush.msra.mxu0 %v211
    %272 = vmatpush.msra.mxu0 %v209
    %273 = vmatpush.msra.mxu0 %v207
    %274 = vmatpush.msra.mxu0 %v205
    %275 = vmatpush.msra.mxu0 %v203
    %276 = vmatmul.f32.gmra.mxu0 %v201
    %v277 = vpop.f32.mrf.mxu0
    %v278 = vadd.f32 %v237, %v277
    %279 = vdwg.mxu0
    %280 = vst [vmem:[#allocation2] sm:$0xff] %v258
    %281 = vst.msk [vmem:[#allocation2 + $0x8] sm:$0xff] %vm68, %v278
    %282 = vst.msk [vmem:[#allocation4] sm:$0xff] %vm173, %v155
    %284 = vrot.lane.b32.xlu0 %v155, 118
    %v285 = vpop.permute.xlu0 %284
    %287 = vst.msk [vmem:[#allocation6] sm:$0xff] %vm173, %v285
    // Predicated region
    $region42: #{tpu_custom_call.1} parent=1 // pred_check
      _
    $region43: #{tpu_custom_call.1} parent=1 // pred_check_branch
      %289 = sbr.rel (0) target = $region45
    $region44: #{tpu_custom_call.1} parent=1 // pred_region
      %291 = vsyncadd [#allocation3], 0
      %s293 = sshll.u32 [#allocation2], 4
      %s294 = int_to_ptr.vmem [resolvable:$true] %s293
      %s295 = sshll.u32 %s10, 4
      %s296 = int_to_ptr.hbm [resolvable:$true] %s295
      %298 = dma.vmem_to_hbm [thread:$0]  %s294, 256, %s296, [#allocation3]
    $region45: #{tpu_custom_call.1} parent=1 // pred_fallthru
      _
    // Predicated region
    $region46: #{tpu_custom_call.1} parent=1 // pred_check
      _
    $region47: #{tpu_custom_call.1} parent=1 // pred_check_branch
      %300 = sbr.rel (0) target = $region49
    $region48: #{tpu_custom_call.1} parent=1 // pred_region
      %302 = vsyncadd [#allocation5], 0
      %s304 = sshll.u32 [#allocation4], 4
      %s305 = int_to_ptr.vmem [resolvable:$true] %s304
      %s306 = sshll.u32 %s11, 4
      %s307 = int_to_ptr.hbm [resolvable:$true] %s306
      %309 = dma.vmem_to_hbm [thread:$0]  %s305, 128, %s307, [#allocation5]
    $region49: #{tpu_custom_call.1} parent=1 // pred_fallthru
      _
    // Predicated region
    $region50: #{tpu_custom_call.1} parent=1 // pred_check
      _
    $region51: #{tpu_custom_call.1} parent=1 // pred_check_branch
      %311 = sbr.rel (0) target = $region53
    $region52: #{tpu_custom_call.1} parent=1 // pred_region
      %313 = vsyncadd [#allocation5], 0
      %s315 = sshll.u32 [#allocation6], 4
      %s316 = int_to_ptr.vmem [resolvable:$true] %s315
      %s317 = sshll.u32 %s12, 4
      %s318 = int_to_ptr.hbm [resolvable:$true] %s317
      %320 = dma.vmem_to_hbm [thread:$0]  %s316, 128, %s318, [#allocation5]
    $region53: #{tpu_custom_call.1} parent=1 // pred_fallthru
      _
    // Predicated region
    $region54: #{tpu_custom_call.1} parent=1 // pred_check
      _
    $region55: #{tpu_custom_call.1} parent=1 // pred_check_branch
      %322 = sbr.rel (0) target = $region57
    $region56: #{tpu_custom_call.1} parent=1 // pred_region
      %324 = dma.done [#allocation3], 256
    $region57: #{tpu_custom_call.1} parent=1 // pred_fallthru
      _
    // Predicated region
    $region58: #{tpu_custom_call.1} parent=1 // pred_check
      _
    $region59: #{tpu_custom_call.1} parent=1 // pred_check_branch
      %326 = sbr.rel (0) target = $region61
    $region60: #{tpu_custom_call.1} parent=1 // pred_region
      %328 = dma.done [#allocation5], 128
    $region61: #{tpu_custom_call.1} parent=1 // pred_fallthru
      _
    // Predicated region
    $region62: #{tpu_custom_call.1} parent=1 // pred_check
      _
    $region63: #{tpu_custom_call.1} parent=1 // pred_check_branch
      %330 = sbr.rel (0) target = $region65
    $region64: #{tpu_custom_call.1} parent=1 // pred_region
      %332 = dma.done [#allocation5], 128
    $region65: #{tpu_custom_call.1} parent=1 // pred_fallthru
      _
    %333 = vsyncpa [#allocation3], 1
    %334 = vsyncpa [#allocation5], 1

</llo_original>
